<compile_context>
chip_gen: v7x
topology: tpu7x:2x2x1
jax: 0.10.0
libtpu: 0.0.40
codegen_flags: <defaults>
</compile_context>

<pallas_src>
import jax
import jax.numpy as jnp
from jax.experimental import pallas as pl
from jax.experimental.pallas import tpu as pltpu


# ----------------------------------------------------------------------------
# Path 1: zero-copy identity (aliased output, no-op kernel body)
# ----------------------------------------------------------------------------
def _alias_noop_kernel(x_hbm_ref, o_hbm_ref):
    # o aliases x in HBM (input_output_aliases={0: 0}); identity requires no
    # data movement, so the body is intentionally empty — zero HBM traffic.
    del x_hbm_ref, o_hbm_ref


def _identity_alias(x):
    return pl.pallas_call(
        _alias_noop_kernel,
        out_shape=jax.ShapeDtypeStruct(x.shape, x.dtype),
        in_specs=[pl.BlockSpec(memory_space=pl.ANY)],
        out_specs=pl.BlockSpec(memory_space=pl.ANY),
        input_output_aliases={0: 0},
    )(x)


# ----------------------------------------------------------------------------
# Path 2: explicit fresh-buffer copy (tiled, lane-dense memcpy)
# ----------------------------------------------------------------------------
def _copy_kernel(x_ref, o_ref):
    o_ref[...] = x_ref[...]


_LANE_CANDIDATES = (2048, 1024, 512, 256, 128)  # widest (lane-dense) first


def _sublane_multiple(itemsize):
    # f32 -> 8 rows/vreg, bf16 -> 16, int8/fp8 -> 32 (sublane packing).
    return {4: 8, 2: 16, 1: 32}.get(itemsize, 8)


def _lane_dense_view(total, sub):
    """Pick (rows, cols) with cols a multiple of 128, preferring wide lanes and
    sublane-aligned row counts.  Returns None for ragged (non-128) sizes."""
    for lane in _LANE_CANDIDATES:
        if total % lane == 0 and (total // lane) % sub == 0:
            return total // lane, lane
    for lane in _LANE_CANDIDATES:
        if total % lane == 0:
            return total // lane, lane
    return None


def _block_budget_bytes():
    """Per-block byte budget, generation-aware.

    in + out, each double-buffered => 4 live blocks; keep that <= phys/2.
    v5e/v6e (128 MiB VMEM) and v7x (64 MiB) both land on an 8 MiB block cap."""
    phys = 64 * 1024 * 1024  # assume the smallest generation (v7x) on failure
    try:
        phys = getattr(pltpu.get_tpu_info(), "vmem_capacity_bytes", phys)
    except Exception:
        pass
    return max(1 << 20, min(8 << 20, phys // 8))


def _row_block(rows, cols, itemsize, sub, block_budget, total_bytes):
    bytes_per_row = cols * itemsize
    budget_rows = max(sub, (block_budget // bytes_per_row) // sub * sub)
    if budget_rows < rows:
        return budget_rows                      # large tensor: budget-sized blocks
    if total_bytes >= (4 << 20) and rows % (2 * sub) == 0:
        return rows // 2                        # v7x: >=2 steps, one per TensorCore
    return rows                                 # small tensor: single block / step


def _identity_copy(x):
    orig_shape = x.shape
    total = int(x.size)
    itemsize = jnp.dtype(x.dtype).itemsize
    sub = _sublane_multiple(itemsize)
    view = _lane_dense_view(total, sub)
    if view is None:
        # Ragged size (not a multiple of 128): no clean lane-dense slab.
        # TODO(synk): aligned-body + masked-tail copy; use the zero-copy alias
        # path instead of a whole-array block (which OOMs VMEM on big tensors).
        return _identity_alias(x)

    rows, cols = view
    x2 = x.reshape(rows, cols)
    block_budget = _block_budget_bytes()
    br = _row_block(rows, cols, itemsize, sub, block_budget, total * itemsize)
    grid = (pl.cdiv(rows, br),)                 # ragged row tail masked by Pallas
    block_bytes = br * cols * itemsize
    vmem_limit = max(16 << 20, 4 * block_bytes + (2 << 20))

    out = pl.pallas_call(
        _copy_kernel,
        out_shape=jax.ShapeDtypeStruct((rows, cols), x2.dtype),
        grid=grid,
        in_specs=[pl.BlockSpec((br, cols), lambda i: (i, 0))],
        out_specs=pl.BlockSpec((br, cols), lambda i: (i, 0)),
        compiler_params=pltpu.CompilerParams(
            dimension_semantics=("parallel",),
            vmem_limit_bytes=int(vmem_limit),
        ),
    )(x2)
    return out.reshape(orig_shape)


# ----------------------------------------------------------------------------
# Public entry point
# ----------------------------------------------------------------------------
def identity(x, *, copy=False):
    """Pallas TPU Identity.forward: returns x.

    copy=False (default): zero-copy aliased pass-through (donate x under jit
    for a true no-op).  copy=True: materialize a fresh HBM buffer via a tiled
    lane-dense copy kernel.
    """
    if x.size == 0:
        return x
    if copy:
        return _identity_copy(x)
    return _identity_alias(x)


if __name__ == "__main__":
    key = jax.random.PRNGKey(0)
    B, C, H, W = 2, 4, 16, 16
    shape, dtype = (B, C, H, W), jnp.float32

    x = jax.random.normal(key, shape, dtype)        # reference (kept alive)
    x_donor = jax.random.normal(key, shape, dtype)  # identical values; donated

    # Primary zero-copy path: aliased output, input donated at the jit boundary.
    ident_zero_copy = jax.jit(identity, donate_argnums=(0,))
    y = jax.block_until_ready(ident_zero_copy(x_donor))
    assert y.shape == x.shape and y.dtype == x.dtype
    assert bool(jnp.all(y == x)), "aliased identity output differs from input"

    # Fallback fresh-buffer path: tiled lane-dense copy kernel.
    y2 = jax.block_until_ready(identity(x, copy=True))
    assert y2.shape == x.shape and y2.dtype == x.dtype
    assert bool(jnp.all(y2 == x)), "copy identity output differs from input"

    print("KERNEL_OK")
</pallas_src>

<mosaic_0001>
module attributes {stable_mosaic.version = 11 : i64} {
  func.func @_alias_noop_kernel(%arg0: memref<2x4x16x16xf32, #tpu.memory_space<any>>, %arg1: memref<2x4x16x16xf32, #tpu.memory_space<any>>) attributes {dimension_semantics = [], scalar_prefetch = 0 : i64, scratch_operands = 0 : i64, tpu.core_type = #tpu.core_type<tc>} {
    return
  }
}

</mosaic_0001>

<llo_original>
// kernel: identity.1
$region0: #{identity.1}
  #allocation0 [shape = 'u32[]', space=smem, size = 0x4, offset = 0x4, fixed_abs, tag = 'smem constant byte address 0x4 - core index']
  #allocation1 [shape = 'u32[144,128]{1,0:T(1,128)}', space=vmem, size = 0x12000, scoped, tag = 'internal scratch']
  %s0 = inlined_call_operand.hbm [shape: f32[2,4,16,16], index: 0, kind: input, shape index: {}, may-alias: {0,1}]
  %s1 = inlined_call_operand.hbm [shape: f32[2,4,16,16], index: 1, kind: output, shape index: {}, may-alias: {0,1}]
  %s2 = sld [smem:[#allocation0]]
  $region2: #{identity.1} parent=0
    _
  %s4 = ssub.s32 1, %s2
  %s5 = scalar_select 0, %s4, %s2

</llo_original>
